<compile_context>
chip_gen: v7x
topology: tpu7x:2x2x1
jax: 0.10.0
libtpu: 0.0.40
codegen_flags: <defaults>
</compile_context>

<pallas_src>
import functools

import jax
import jax.numpy as jnp
from jax import lax
from jax.experimental import pallas as pl
from jax.experimental.pallas import tpu as pltpu

_EPS_DEFAULT = 1e-5
# f32 footprint of x below which the fused single-block fast path is used.
# Sized against v7x's 64 MiB per-TC VMEM (x block + out block + f32 temps).
_FAST_PATH_MAX_BYTES = 6 << 20
# Target f32 bytes per (C, T) lane tile in the two-pass path.
_TILE_BYTES = 4 << 20
# Scoped VMEM limit: below v7x 64 MiB physical, plenty of room on v5e/v6e.
_VMEM_LIMIT = 48 << 20


# ----------------------------------------------------------------------------
# Pass 1 kernel: per-(batch, lane-tile) partial per-channel sum / sum-sq.
#   x_ref: (C, T) tile;  sum_ref / sumsq_ref: (C, 1) partials (independent per
#   grid step -> no accumulator, both grid axes "parallel").
# ----------------------------------------------------------------------------
def _stats_kernel(x_ref, sum_ref, sumsq_ref, *, hw, tile, mask_tail):
    x = x_ref[...].astype(jnp.float32)                      # (C, T)
    if mask_tail:
        rem = hw - pl.program_id(1) * tile
        lane = lax.broadcasted_iota(jnp.int32, x.shape, 1)
        x = jnp.where(lane < rem, x, 0.0)
    sum_ref[...] = jnp.sum(x, axis=1, keepdims=True)
    sumsq_ref[...] = jnp.sum(x * x, axis=1, keepdims=True)


# ----------------------------------------------------------------------------
# Pass 2 kernel: folded per-channel FMA, out = scale * x + bias.
#   scale_ref / bias_ref: (C, 1) f32;  x_ref / o_ref: (C, T).
#   (Tail tiles compute on padded lanes; OOB stores are dropped.)
# ----------------------------------------------------------------------------
def _apply_kernel(scale_ref, bias_ref, x_ref, o_ref):
    x = x_ref[...].astype(jnp.float32)
    o_ref[...] = (x * scale_ref[...] + bias_ref[...]).astype(o_ref.dtype)


# ----------------------------------------------------------------------------
# Fused single-block kernel for small inputs (everything VMEM-resident).
# Centered (PyTorch-style) variance: mean pass, then (x-mean)^2 pass.
#   a_ref, b_ref: (1,) SMEM scalars; x_ref/o_ref: (N, C, HW);
#   gamma_ref/beta_ref: (C, 1).
# ----------------------------------------------------------------------------
def _fused_kernel(a_ref, b_ref, x_ref, gamma_ref, beta_ref, o_ref, *, eps):
    n_batch, n_chan, hw = x_ref.shape
    inv_count = 1.0 / float(n_batch * hw)
    unroll = n_batch <= 8
    zero = jnp.zeros((n_chan, 1), jnp.float32)

    def sum_body(n, s):
        return s + jnp.sum(x_ref[n].astype(jnp.float32), axis=1, keepdims=True)

    mean = lax.fori_loop(0, n_batch, sum_body, zero, unroll=unroll) * inv_count

    def var_body(n, sq):
        d = x_ref[n].astype(jnp.float32) - mean
        return sq + jnp.sum(d * d, axis=1, keepdims=True)

    var = lax.fori_loop(0, n_batch, var_body, zero, unroll=unroll) * inv_count
    inv_std = lax.rsqrt(var + eps)

    g = gamma_ref[...]                                # (C, 1)
    a = a_ref[0]
    b = b_ref[0]
    scale = a + b * g * inv_std                       # (C, 1)
    bias = b * (beta_ref[...] - g * mean * inv_std)   # (C, 1)

    def apply_body(n, carry):
        xn = x_ref[n].astype(jnp.float32)
        o_ref[n] = (xn * scale + bias).astype(o_ref.dtype)
        return carry

    lax.fori_loop(0, n_batch, apply_body, 0, unroll=unroll)


# ----------------------------------------------------------------------------
# Tile picker: fixed ~4 MiB target tile, multiple of 128 lanes, decoupled from
# HW divisibility (tails are masked).  A full-extent block is used only when
# the whole row already fits the budget (always a legal block shape).
# ----------------------------------------------------------------------------
def _pick_lane_tile(hw, c, max_tile_bytes=_TILE_BYTES):
    c_pad = max(8, -(-c // 8) * 8)
    hw_pad = -(-hw // 128) * 128
    t = max(128, (max_tile_bytes // (c_pad * 4)) // 128 * 128)
    if hw_pad <= t:
        return hw
    return t


# ----------------------------------------------------------------------------
# Tiled two-pass path.
# ----------------------------------------------------------------------------
def _two_pass(x3, a1, b1, gamma2, beta2, eps):
    n_batch, n_chan, hw = x3.shape
    tile = _pick_lane_tile(hw, n_chan)
    n_t = pl.cdiv(hw, tile)
    mask_tail = (hw % tile) != 0
    itemsize = x3.dtype.itemsize

    sums, sumsqs = pl.pallas_call(
        functools.partial(_stats_kernel, hw=hw, tile=tile, mask_tail=mask_tail),
        out_shape=(
            jax.ShapeDtypeStruct((n_batch, n_t, n_chan, 1), jnp.float32),
            jax.ShapeDtypeStruct((n_batch, n_t, n_chan, 1), jnp.float32),
        ),
        grid_spec=pltpu.PrefetchScalarGridSpec(
            num_scalar_prefetch=0,
            grid=(n_batch, n_t),
            in_specs=[
                pl.BlockSpec((None, n_chan, tile), lambda n, t: (n, 0, t)),
            ],
            out_specs=(
                pl.BlockSpec((None, None, n_chan, 1), lambda n, t: (n, t, 0, 0)),
                pl.BlockSpec((None, None, n_chan, 1), lambda n, t: (n, t, 0, 0)),
            ),
        ),
        compiler_params=pltpu.CompilerParams(
            dimension_semantics=("parallel", "parallel"),
            vmem_limit_bytes=_VMEM_LIMIT),
        cost_estimate=pl.CostEstimate(
            flops=3 * x3.size, transcendentals=0,
            bytes_accessed=x3.size * itemsize),
    )(x3)

    # Tiny per-channel math in plain JAX; fold everything into one FMA.
    # NOTE: one-pass E[x^2]-mean^2 (clamped at 0) can lose precision when
    # |mean| >> std; acceptable for typical activations.
    count = float(n_batch * hw)
    s = jnp.sum(sums, axis=(0, 1))                    # (C, 1)
    sq = jnp.sum(sumsqs, axis=(0, 1))                 # (C, 1)
    mean = s * (1.0 / count)
    var = jnp.maximum(sq * (1.0 / count) - mean * mean, 0.0)
    inv_std = lax.rsqrt(var + eps)
    a_s = a1[0]
    b_s = b1[0]
    scale = (a_s + b_s * gamma2 * inv_std).astype(jnp.float32)
    bias = (b_s * (beta2 - gamma2 * mean * inv_std)).astype(jnp.float32)

    out3 = pl.pallas_call(
        _apply_kernel,
        out_shape=jax.ShapeDtypeStruct((n_batch, n_chan, hw), x3.dtype),
        grid_spec=pltpu.PrefetchScalarGridSpec(
            num_scalar_prefetch=0,
            grid=(n_batch, n_t),
            in_specs=[
                pl.BlockSpec((n_chan, 1), lambda n, t: (0, 0)),
                pl.BlockSpec((n_chan, 1), lambda n, t: (0, 0)),
                pl.BlockSpec((None, n_chan, tile), lambda n, t: (n, 0, t)),
            ],
            out_specs=pl.BlockSpec((None, n_chan, tile),
                                   lambda n, t: (n, 0, t)),
        ),
        compiler_params=pltpu.CompilerParams(
            dimension_semantics=("parallel", "parallel"),
            vmem_limit_bytes=_VMEM_LIMIT),
        cost_estimate=pl.CostEstimate(
            flops=2 * x3.size, transcendentals=0,
            bytes_accessed=2 * x3.size * itemsize),
    )(scale, bias, x3)
    return out3


# ----------------------------------------------------------------------------
# Fused VMEM-resident path for small inputs.
# ----------------------------------------------------------------------------
def _fused_small(x3, a1, b1, gamma2, beta2, eps):
    n_batch, n_chan, hw = x3.shape
    return pl.pallas_call(
        functools.partial(_fused_kernel, eps=eps),
        out_shape=jax.ShapeDtypeStruct((n_batch, n_chan, hw), x3.dtype),
        in_specs=[
            pl.BlockSpec(memory_space=pltpu.MemorySpace.SMEM),       # a
            pl.BlockSpec(memory_space=pltpu.MemorySpace.SMEM),       # b
            pl.BlockSpec((n_batch, n_chan, hw), lambda: (0, 0, 0)),  # x
            pl.BlockSpec((n_chan, 1), lambda: (0, 0)),               # gamma
            pl.BlockSpec((n_chan, 1), lambda: (0, 0)),               # beta
        ],
        out_specs=pl.BlockSpec((n_batch, n_chan, hw), lambda: (0, 0, 0)),
        compiler_params=pltpu.CompilerParams(vmem_limit_bytes=_VMEM_LIMIT),
        cost_estimate=pl.CostEstimate(
            flops=9 * x3.size, transcendentals=n_chan,
            bytes_accessed=2 * x3.size * x3.dtype.itemsize),
    )(a1, b1, x3, gamma2, beta2)


# ----------------------------------------------------------------------------
# Public wrapper: NCHW in, NCHW out.  No transposes — only free reshapes.
# ----------------------------------------------------------------------------
def adaptive_batch_norm_2d(x_nchw, a, b, gamma, beta, eps=_EPS_DEFAULT,
                           force_two_pass=False):
    n, c, h, w = x_nchw.shape
    hw = h * w
    x3 = x_nchw.reshape(n, c, hw)                     # contiguous -> free
    a1 = jnp.asarray(a, jnp.float32).reshape(1)
    b1 = jnp.asarray(b, jnp.float32).reshape(1)
    gamma2 = jnp.asarray(gamma, jnp.float32).reshape(c, 1)
    beta2 = jnp.asarray(beta, jnp.float32).reshape(c, 1)

    x_f32_bytes = 4 * n * c * hw
    if force_two_pass or x_f32_bytes > _FAST_PATH_MAX_BYTES:
        out3 = _two_pass(x3, a1, b1, gamma2, beta2, eps)
    else:
        out3 = _fused_small(x3, a1, b1, gamma2, beta2, eps)
    return out3.reshape(n, c, h, w)


# ----------------------------------------------------------------------------
# Plain-JAX reference matching PyTorch AdaptiveBatchNorm2d.forward (train mode).
# ----------------------------------------------------------------------------
def reference(x_nchw, a, b, gamma, beta, eps=_EPS_DEFAULT):
    x = x_nchw.astype(jnp.float32)
    mean = jnp.mean(x, axis=(0, 2, 3), keepdims=True)
    var = jnp.mean((x - mean) ** 2, axis=(0, 2, 3), keepdims=True)
    bn = (x - mean) / jnp.sqrt(var + eps)
    bn = bn * gamma.reshape(1, -1, 1, 1) + beta.reshape(1, -1, 1, 1)
    return a.reshape(()) * x + b.reshape(()) * bn


if __name__ == "__main__":
    key = jax.random.PRNGKey(0)
    kx, kg, kb = jax.random.split(key, 3)

    N, C, H, W = 2, 4, 16, 16
    x = jax.random.normal(kx, (N, C, H, W), dtype=jnp.float32)

    # Deterministic parameters (torch.FloatTensor(1,1,1,1) is uninitialized; we
    # pick fixed values).  BN affine defaults gamma=1, beta=0 — perturb slightly.
    a = jnp.array([0.7], dtype=jnp.float32)
    b = jnp.array([0.3], dtype=jnp.float32)
    gamma = (1.0 + 0.1 * jax.random.normal(kg, (C,))).astype(jnp.float32)
    beta = (0.1 * jax.random.normal(kb, (C,))).astype(jnp.float32)

    ref = reference(x, a, b, gamma, beta)

    # Fast (VMEM-resident fused) path — selected automatically at this size.
    out_fast = jax.block_until_ready(adaptive_batch_norm_2d(x, a, b, gamma, beta))
    assert out_fast.shape == (N, C, H, W)
    assert jnp.allclose(out_fast, ref, rtol=1e-5, atol=1e-5), float(
        jnp.max(jnp.abs(out_fast - ref)))

    # Tiled, pipelined two-pass path (used for large activations) — also verify.
    out_tiled = jax.block_until_ready(
        adaptive_batch_norm_2d(x, a, b, gamma, beta, force_two_pass=True))
    assert jnp.allclose(out_tiled, ref, rtol=1e-5, atol=1e-5), float(
        jnp.max(jnp.abs(out_tiled - ref)))

    print("KERNEL_OK")
</pallas_src>

<mosaic_0001>
module attributes {stable_mosaic.version = 11 : i64} {
  func.func @_fused_kernel(%arg0: memref<1xf32, #tpu.memory_space<smem>>, %arg1: memref<1xf32, #tpu.memory_space<smem>>, %arg2: memref<2x4x256xf32, #tpu.memory_space<vmem>>, %arg3: memref<4x1xf32, #tpu.memory_space<vmem>>, %arg4: memref<4x1xf32, #tpu.memory_space<vmem>>, %arg5: memref<2x4x256xf32, #tpu.memory_space<vmem>>) attributes {dimension_semantics = [], scalar_prefetch = 0 : i64, scratch_operands = 0 : i64, tpu.core_type = #tpu.core_type<tc>} {
    %cst = arith.constant 0.000000e+00 : f32
    %0 = vector.broadcast %cst : f32 to vector<4x1xf32>
    %c0_i32 = arith.constant 0 : i32
    %1 = arith.index_cast %c0_i32 : i32 to index
    %c0 = arith.constant 0 : index
    %c0_0 = arith.constant 0 : index
    %2 = vector.load %arg2[%1, %c0, %c0_0] : memref<2x4x256xf32, #tpu.memory_space<vmem>>, vector<1x4x256xf32>
    %3 = vector.shape_cast %2 : vector<1x4x256xf32> to vector<4x256xf32>
    %cst_1 = arith.constant dense<0.000000e+00> : vector<4xf32>
    %4 = vector.multi_reduction <add>, %3, %cst_1 [1] : vector<4x256xf32> to vector<4xf32>
    %5 = vector.shape_cast %4 : vector<4xf32> to vector<4x1xf32>
    %6 = arith.addf %0, %5 : vector<4x1xf32>
    %c1_i32 = arith.constant 1 : i32
    %7 = arith.index_cast %c1_i32 : i32 to index
    %c0_2 = arith.constant 0 : index
    %c0_3 = arith.constant 0 : index
    %8 = vector.load %arg2[%7, %c0_2, %c0_3] : memref<2x4x256xf32, #tpu.memory_space<vmem>>, vector<1x4x256xf32>
    %9 = vector.shape_cast %8 : vector<1x4x256xf32> to vector<4x256xf32>
    %cst_4 = arith.constant dense<0.000000e+00> : vector<4xf32>
    %10 = vector.multi_reduction <add>, %9, %cst_4 [1] : vector<4x256xf32> to vector<4xf32>
    %11 = vector.shape_cast %10 : vector<4xf32> to vector<4x1xf32>
    %12 = arith.addf %6, %11 : vector<4x1xf32>
    %c2_i32 = arith.constant 2 : i32
    %cst_5 = arith.constant 0.001953125 : f32
    %13 = vector.broadcast %cst_5 : f32 to vector<4x1xf32>
    %14 = arith.mulf %12, %13 : vector<4x1xf32>
    %c0_i32_6 = arith.constant 0 : i32
    %15 = arith.index_cast %c0_i32_6 : i32 to index
    %c0_7 = arith.constant 0 : index
    %c0_8 = arith.constant 0 : index
    %16 = vector.load %arg2[%15, %c0_7, %c0_8] : memref<2x4x256xf32, #tpu.memory_space<vmem>>, vector<1x4x256xf32>
    %17 = vector.shape_cast %16 : vector<1x4x256xf32> to vector<4x256xf32>
    %18 = vector.broadcast %14 : vector<4x1xf32> to vector<4x256xf32>
    %19 = arith.subf %17, %18 : vector<4x256xf32>
    %20 = arith.mulf %19, %19 : vector<4x256xf32>
    %cst_9 = arith.constant dense<0.000000e+00> : vector<4xf32>
    %21 = vector.multi_reduction <add>, %20, %cst_9 [1] : vector<4x256xf32> to vector<4xf32>
    %22 = vector.shape_cast %21 : vector<4xf32> to vector<4x1xf32>
    %23 = arith.addf %0, %22 : vector<4x1xf32>
    %c1_i32_10 = arith.constant 1 : i32
    %24 = arith.index_cast %c1_i32_10 : i32 to index
    %c0_11 = arith.constant 0 : index
    %c0_12 = arith.constant 0 : index
    %25 = vector.load %arg2[%24, %c0_11, %c0_12] : memref<2x4x256xf32, #tpu.memory_space<vmem>>, vector<1x4x256xf32>
    %26 = vector.shape_cast %25 : vector<1x4x256xf32> to vector<4x256xf32>
    %27 = vector.broadcast %14 : vector<4x1xf32> to vector<4x256xf32>
    %28 = arith.subf %26, %27 : vector<4x256xf32>
    %29 = arith.mulf %28, %28 : vector<4x256xf32>
    %cst_13 = arith.constant dense<0.000000e+00> : vector<4xf32>
    %30 = vector.multi_reduction <add>, %29, %cst_13 [1] : vector<4x256xf32> to vector<4xf32>
    %31 = vector.shape_cast %30 : vector<4xf32> to vector<4x1xf32>
    %32 = arith.addf %23, %31 : vector<4x1xf32>
    %c2_i32_14 = arith.constant 2 : i32
    %cst_15 = arith.constant 0.001953125 : f32
    %33 = vector.broadcast %cst_15 : f32 to vector<4x1xf32>
    %34 = arith.mulf %32, %33 : vector<4x1xf32>
    %cst_16 = arith.constant 9.99999974E-6 : f32
    %35 = vector.broadcast %cst_16 : f32 to vector<4x1xf32>
    %36 = arith.addf %34, %35 : vector<4x1xf32>
    %37 = math.rsqrt %36 : vector<4x1xf32>
    %c0_17 = arith.constant 0 : index
    %c0_18 = arith.constant 0 : index
    %38 = vector.load %arg3[%c0_17, %c0_18] : memref<4x1xf32, #tpu.memory_space<vmem>>, vector<4x1xf32>
    %c0_19 = arith.constant 0 : index
    %39 = memref.load %arg0[%c0_19] : memref<1xf32, #tpu.memory_space<smem>>
    %c0_20 = arith.constant 0 : index
    %40 = memref.load %arg1[%c0_20] : memref<1xf32, #tpu.memory_space<smem>>
    %41 = vector.broadcast %40 : f32 to vector<4x1xf32>
    %42 = arith.mulf %41, %38 : vector<4x1xf32>
    %43 = arith.mulf %42, %37 : vector<4x1xf32>
    %44 = vector.broadcast %39 : f32 to vector<4x1xf32>
    %45 = arith.addf %44, %43 : vector<4x1xf32>
    %c0_21 = arith.constant 0 : index
    %c0_22 = arith.constant 0 : index
    %46 = vector.load %arg4[%c0_21, %c0_22] : memref<4x1xf32, #tpu.memory_space<vmem>>, vector<4x1xf32>
    %47 = arith.mulf %38, %14 : vector<4x1xf32>
    %48 = arith.mulf %47, %37 : vector<4x1xf32>
    %49 = arith.subf %46, %48 : vector<4x1xf32>
    %50 = vector.broadcast %40 : f32 to vector<4x1xf32>
    %51 = arith.mulf %50, %49 : vector<4x1xf32>
    %c0_i32_23 = arith.constant 0 : i32
    %52 = arith.index_cast %c0_i32_23 : i32 to index
    %c0_24 = arith.constant 0 : index
    %c0_25 = arith.constant 0 : index
    %53 = vector.load %arg2[%52, %c0_24, %c0_25] : memref<2x4x256xf32, #tpu.memory_space<vmem>>, vector<1x4x256xf32>
    %54 = vector.shape_cast %53 : vector<1x4x256xf32> to vector<4x256xf32>
    %55 = vector.broadcast %45 : vector<4x1xf32> to vector<4x256xf32>
    %56 = arith.mulf %54, %55 : vector<4x256xf32>
    %57 = vector.broadcast %51 : vector<4x1xf32> to vector<4x256xf32>
    %58 = arith.addf %56, %57 : vector<4x256xf32>
    %59 = arith.index_cast %c0_i32_23 : i32 to index
    %c0_26 = arith.constant 0 : index
    %c0_27 = arith.constant 0 : index
    %60 = vector.load %arg5[%59, %c0_26, %c0_27] : memref<2x4x256xf32, #tpu.memory_space<vmem>>, vector<1x4x256xf32>
    %61 = vector.shape_cast %60 : vector<1x4x256xf32> to vector<4x256xf32>
    %62 = vector.shape_cast %58 : vector<4x256xf32> to vector<1x4x256xf32>
    tpu.vector_store %arg5[%59, %c0_26, %c0_27], %62 {strides = array<i32>} : memref<2x4x256xf32, #tpu.memory_space<vmem>>, vector<1x4x256xf32>,
    %c1_i32_28 = arith.constant 1 : i32
    %63 = arith.index_cast %c1_i32_28 : i32 to index
    %c0_29 = arith.constant 0 : index
    %c0_30 = arith.constant 0 : index
    %64 = vector.load %arg2[%63, %c0_29, %c0_30] : memref<2x4x256xf32, #tpu.memory_space<vmem>>, vector<1x4x256xf32>
    %65 = vector.shape_cast %64 : vector<1x4x256xf32> to vector<4x256xf32>
    %66 = vector.broadcast %45 : vector<4x1xf32> to vector<4x256xf32>
    %67 = arith.mulf %65, %66 : vector<4x256xf32>
    %68 = vector.broadcast %51 : vector<4x1xf32> to vector<4x256xf32>
    %69 = arith.addf %67, %68 : vector<4x256xf32>
    %70 = arith.index_cast %c1_i32_28 : i32 to index
    %c0_31 = arith.constant 0 : index
    %c0_32 = arith.constant 0 : index
    %71 = vector.load %arg5[%70, %c0_31, %c0_32] : memref<2x4x256xf32, #tpu.memory_space<vmem>>, vector<1x4x256xf32>
    %72 = vector.shape_cast %71 : vector<1x4x256xf32> to vector<4x256xf32>
    %73 = vector.shape_cast %69 : vector<4x256xf32> to vector<1x4x256xf32>
    tpu.vector_store %arg5[%70, %c0_31, %c0_32], %73 {strides = array<i32>} : memref<2x4x256xf32, #tpu.memory_space<vmem>>, vector<1x4x256xf32>,
    %c2_i32_33 = arith.constant 2 : i32
    return
  }
}

</mosaic_0001>

<llo_original>
// kernel: tpu_custom_call.1
$region0: #{tpu_custom_call.1}
  #allocation0 [shape = 'u32[]', space=smem, size = 0x4, offset = 0x4, fixed_abs, tag = 'smem constant byte address 0x4 - core index']
  #allocation1 [shape = 'u32[144,128]{1,0:T(1,128)}', space=vmem, size = 0x12000, scoped, tag = 'internal scratch']
  #allocation2 [shape = 'f32[1]{0:T(128)S(6)}', space=smem, size = 0x200, scoped, tag = 'scoped memory for tpu_custom_call.1']
  #allocation3 [shape = 'f32[1]{0:T(128)S(6)}', space=smem, size = 0x200, scoped, tag = 'scoped memory for tpu_custom_call.1']
  %s0 = inlined_call_operand.<no memory space> [shape: f32[1], index: 0, kind: input, shape index: {}]
  %s1 = inlined_call_operand.<no memory space> [shape: f32[1], index: 1, kind: input, shape index: {}]
  %s2 = inlined_call_operand.vmem [shape: f32[2,4,256], index: 2, kind: input, shape index: {}]
  %s3 = inlined_call_operand.vmem [shape: f32[4,1], index: 3, kind: input, shape index: {}]
  %s4 = inlined_call_operand.vmem [shape: f32[4,1], index: 4, kind: input, shape index: {}]
  %s5 = inlined_call_operand.hbm [shape: f32[2,4,256], index: 5, kind: output, shape index: {}]
  %s6 = sld [smem:[#allocation0]]
  $region30: #{tpu_custom_call.1} parent=0
    _
  %s8 = ssub.s32 1, %s6
  %s9 = scalar_select 0, %s8, %s6
  %10 = sst [smem:[#allocation2]] %s0
  %11 = sst [smem:[#allocation3]] %s1
  $region1: #{tpu_custom_call.1} parent=0
    #allocation4 [shape = 'u8[8192]{0}', space=vmem, size = 0x2000, scoped, tag = 'output window, operand 0, single buffered']
    #allocation5 [shape = 's32[1]{0}', space=sflag, size = 0x4, scoped, tag = 'scoped memory for tpu_custom_call.1']
    %12 = vsyncpa [#allocation5], 0
    // Predicated region
    $region2: #{tpu_custom_call.1} parent=1 // pred_check
      _
    $region3: #{tpu_custom_call.1} parent=1 // pred_check_branch
      %14 = sbr.rel (0) target = $region5
    $region4: #{tpu_custom_call.1} parent=1 // pred_region
      _
    $region5: #{tpu_custom_call.1} parent=1 // pred_fallthru
      _
    // Predicated region
    $region6: #{tpu_custom_call.1} parent=1 // pred_check
      _
    $region7: #{tpu_custom_call.1} parent=1 // pred_check_branch
      %16 = sbr.rel (0) target = $region9
    $region8: #{tpu_custom_call.1} parent=1 // pred_region
      _
    $region9: #{tpu_custom_call.1} parent=1 // pred_fallthru
      _
    // Predicated region
    $region10: #{tpu_custom_call.1} parent=1 // pred_check
      _
    $region11: #{tpu_custom_call.1} parent=1 // pred_check_branch
      %18 = sbr.rel (0) target = $region13
    $region12: #{tpu_custom_call.1} parent=1 // pred_region
      _
    $region13: #{tpu_custom_call.1} parent=1 // pred_fallthru
      _
    // Predicated region
    $region14: #{tpu_custom_call.1} parent=1 // pred_check
      _
    $region15: #{tpu_custom_call.1} parent=1 // pred_check_branch
      %20 = sbr.rel (0) target = $region17
    $region16: #{tpu_custom_call.1} parent=1 // pred_region
      _
    $region17: #{tpu_custom_call.1} parent=1 // pred_fallthru
      _
    // Predicated region
    $region18: #{tpu_custom_call.1} parent=1 // pred_check
      _
    $region19: #{tpu_custom_call.1} parent=1 // pred_check_branch
      %22 = sbr.rel (0) target = $region21
    $region20: #{tpu_custom_call.1} parent=1 // pred_region
      _
    $region21: #{tpu_custom_call.1} parent=1 // pred_fallthru
      _
    %v23 = vld [vmem:[%s2] sm:$0xff]
    %v25 = vcombine.high %v23, %v23
    %vm27 = vcmask 1043456
    %v28 = vsel %vm27, %v23, 0.0
    %v29 = vsel %vm27, %v25, 0.0
    %v30 = vadd.f32 %v28, %v29
    %31 = vadd.xlane.f32.xlu0 %v30
    %v32 = vpop.xlane.xlu0 %31
    %v33 = vadd.f32 %v32, 0.0
    %s34 = scalar_lea.vmem %s2, 8
    %v35 = vld [vmem:[%s34] sm:$0xff]
    %v37 = vcombine.high %v35, %v35
    %v39 = vsel %vm27, %v35, 0.0
    %v40 = vsel %vm27, %v37, 0.0
    %v41 = vadd.f32 %v39, %v40
    %42 = vadd.xlane.f32.xlu0 %v41
    %v43 = vpop.xlane.xlu0 %42
    %v44 = vadd.f32 %v33, %v43
    %v45 = vmul.f32 %v44, 0.001953125
    %v48 = vunpack.c.l.s4 839922192
    %v49 = vunpack.c.0.s8 %v48
    %v50 = vlaneseq
    %v51 = vshrl.u32 %v50, 7
    %v52 = vsub.s32 %v49, %v51
    %v53 = vrot.slane %v45, %v52
    %v55 = vsub.f32 %v23, %v53
    %v56 = vmul.f32 %v55, %v55
    %v58 = vcombine.high %v56, %v56
    %v60 = vsel %vm27, %v56, 0.0
    %v61 = vsel %vm27, %v58, 0.0
    %v62 = vadd.f32 %v60, %v61
    %63 = vadd.xlane.f32.xlu0 %v62
    %v64 = vpop.xlane.xlu0 %63
    %v65 = vadd.f32 %v64, 0.0
    %v66 = vsub.f32 %v35, %v53
    %v67 = vmul.f32 %v66, %v66
    %v69 = vcombine.high %v67, %v67
    %v71 = vsel %vm27, %v67, 0.0
    %v72 = vsel %vm27, %v69, 0.0
    %v73 = vadd.f32 %v71, %v72
    %74 = vadd.xlane.f32.xlu0 %v73
    %v75 = vpop.xlane.xlu0 %74
    %v76 = vadd.f32 %v65, %v75
    %v77 = vmul.f32 %v76, 0.001953125
    %v78 = vadd.f32 %v77, 1e-05
    %v79 = vrsqrt.pop %v78
    %v80 = vld [vmem:[%s3] sm:$0xf]
    %s81 = sld [smem:[#allocation2]]
    %s82 = sld [smem:[#allocation3]]
    %v83 = vstv %s82
    %v84 = vmul.f32 %v83, %v80
    %v85 = vmul.f32 %v84, %v79
    %v86 = vstv %s81
    %v87 = vadd.f32 %v86, %v85
    %v88 = vld [vmem:[%s4] sm:$0xf]
    %v89 = vmul.f32 %v80, %v45
    %v90 = vmul.f32 %v89, %v79
    %v91 = vsub.f32 %v88, %v90
    %v92 = vmul.f32 %v83, %v91
    %94 = vset.pattern.permute.xlu0 0
    %95 = vperm.xlu0 %94, %v87
    %v96 = vpop.permute.xlu0 %95
    %v98 = vunpack.c.l.s4 839922192
    %v99 = vunpack.c.0.s8 %v98
    %v100 = vlaneseq
    %v101 = vshrl.u32 %v100, 7
    %v102 = vsub.s32 %v99, %v101
    %v103 = vrot.slane %v96, %v102
    %v105 = vmul.f32 %v23, %v103
    %107 = vset.pattern.permute.xlu0 0
    %108 = vperm.xlu0 %107, %v92
    %v109 = vpop.permute.xlu0 %108
    %v111 = vunpack.c.l.s4 839922192
    %v112 = vunpack.c.0.s8 %v111
    %v113 = vlaneseq
    %v114 = vshrl.u32 %v113, 7
    %v115 = vsub.s32 %v112, %v114
    %v116 = vrot.slane %v109, %v115
    %v118 = vadd.f32 %v105, %v116
    %119 = vst [vmem:[#allocation4] sm:$0xff] %v118
    %v120 = vld [vmem:[%s34] sm:$0xff]
    %v121 = vmul.f32 %v120, %v103
    %v122 = vadd.f32 %v121, %v116
    %s123 = scalar_lea.vmem [#allocation4], 8
    %124 = vst [vmem:[%s123] sm:$0xff] %v122
    // Predicated region
    $region22: #{tpu_custom_call.1} parent=1 // pred_check
      _
    $region23: #{tpu_custom_call.1} parent=1 // pred_check_branch
      %126 = sbr.rel (0) target = $region25
    $region24: #{tpu_custom_call.1} parent=1 // pred_region
      %s128 = ssub.s32 256, 256
      %129 = vsyncadd [#allocation5], %s128
      %s130 = sshll.u32 [#allocation4], 4
      %s131 = int_to_ptr.vmem [resolvable:$true] %s130
      %136 = dma.vmem_to_hbm [thread:$0]  %s131, 256, %s5, [#allocation5], 128, 128, 8
    $region25: #{tpu_custom_call.1} parent=1 // pred_fallthru
      _
    // Predicated region
    $region26: #{tpu_custom_call.1} parent=1 // pred_check
      _
    $region27: #{tpu_custom_call.1} parent=1 // pred_check_branch
      %138 = sbr.rel (0) target = $region29
    $region28: #{tpu_custom_call.1} parent=1 // pred_region
      %139 = dma.done [#allocation5], 256
    $region29: #{tpu_custom_call.1} parent=1 // pred_fallthru
      _
    %140 = vsyncpa [#allocation5], 1

</llo_original>
